<compile_context>
chip_gen: v7x
topology: tpu7x:2x2x1
jax: 0.10.0
libtpu: 0.0.40
codegen_flags: <defaults>
</compile_context>

<pallas_src>
import jax
import jax.numpy as jnp
from jax.experimental import pallas as pl
from jax.experimental.pallas import tpu as pltpu


def _cdiv(a, b):
    return (a + b - 1) // b


def _round_up(n, m):
    return ((n + m - 1) // m) * m


def _pick_tm(n_rows, sub, tm_max):
    """Row-tile size: single tile for tiny batches, >=2 tiles otherwise."""
    if n_rows <= 2 * sub:
        # Block row dim == full array dim -> always a legal block shape.
        return n_rows
    # Split into at least two row tiles so v7x's 2 TensorCores both get work
    # on the "parallel" axis; cap at tm_max for the large-N path.
    return min(_round_up(_cdiv(n_rows, 2), sub), tm_max)


def _rcaid_mlp_kernel(x_ref, w1_ref, b1_ref, w2_ref, b2_ref, o_ref):
    # fc1: x @ W1 (MXU, f32 accumulation), bias add + ReLU in f32 (VPU).
    h = jnp.dot(x_ref[...], w1_ref[...], preferred_element_type=jnp.float32)
    h = jnp.maximum(h + b1_ref[...], 0.0)
    # fc2: feed the MXU in the weight dtype (f32 or bf16), accumulate in f32.
    h = h.astype(w2_ref.dtype)
    o = jnp.dot(h, w2_ref[...], preferred_element_type=jnp.float32)
    o_ref[...] = (o + b2_ref[...]).astype(o_ref.dtype)


def prepare_rcaid_mlp_params(fc1_w, fc1_b, fc2_w, fc2_b, *, use_bf16=False):
    """One-time parameter preparation (call at init, NOT per forward).

    fc1_w: [D_out, D_in]   (PyTorch fc1.weight layout)
    fc1_b: [D_out]
    fc2_w: [D_out, D_out]  (PyTorch fc2.weight layout)
    fc2_b: [D_out]
    """
    wdtype = jnp.bfloat16 if use_bf16 else jnp.float32
    w1 = jnp.asarray(fc1_w, jnp.float32).T.astype(wdtype)   # [D_in,  D_out]
    w2 = jnp.asarray(fc2_w, jnp.float32).T.astype(wdtype)   # [D_out, D_out]
    b1 = jnp.asarray(fc1_b, jnp.float32).reshape(1, -1)     # biases stay f32
    b2 = jnp.asarray(fc2_b, jnp.float32).reshape(1, -1)
    return (w1, b1, w2, b2)


def rcaid_mlp(x, params, *, tm_max=512):
    """Forward pass: relu(x @ W1 + b1) @ W2 + b2.   x: [N, D_in] -> [N, D_out]."""
    w1, b1, w2, b2 = params
    N, D_in = x.shape
    D_out = w1.shape[1]

    use_bf16 = (w1.dtype == jnp.bfloat16)
    xk = x.astype(jnp.bfloat16) if use_bf16 else x

    # Sublane multiple for the row-tile dim (f32: 8, bf16: 16).
    sub = 16 if use_bf16 else 8
    tm = _pick_tm(N, sub, tm_max)
    grid = (_cdiv(N, tm),)

    # VMEM budget: double-buffered x/out tiles + resident weights, with headroom.
    # (Kept <= 48 MiB -> safe under v7x's 64 MiB; v5e/v6e have 128 MiB.  For
    # large D on v5e/v6e this cap could be raised via pltpu.get_tpu_info().)
    x_item = jnp.dtype(xk.dtype).itemsize
    w_item = jnp.dtype(w1.dtype).itemsize
    tile_bytes = 2 * tm * (D_in * x_item + D_out * 4)            # x tile + f32 out tile
    wgt_bytes = 2 * ((D_in + D_out) * D_out * w_item + 2 * D_out * 4)
    vmem_limit = int(1.5 * (tile_bytes + wgt_bytes)) + (4 << 20)
    vmem_limit = min(max(vmem_limit, 16 << 20), 48 << 20)

    out = pl.pallas_call(
        _rcaid_mlp_kernel,
        out_shape=jax.ShapeDtypeStruct((N, D_out), jnp.float32),
        grid_spec=pltpu.PrefetchScalarGridSpec(
            num_scalar_prefetch=0,
            grid=grid,
            in_specs=[
                pl.BlockSpec((tm, D_in), lambda i: (i, 0)),       # row tile of x
                pl.BlockSpec((D_in, D_out), lambda i: (0, 0)),    # W1 (VMEM-resident)
                pl.BlockSpec((1, D_out), lambda i: (0, 0)),       # b1 (f32)
                pl.BlockSpec((D_out, D_out), lambda i: (0, 0)),   # W2 (VMEM-resident)
                pl.BlockSpec((1, D_out), lambda i: (0, 0)),       # b2 (f32)
            ],
            out_specs=pl.BlockSpec((tm, D_out), lambda i: (i, 0)),
        ),
        compiler_params=pltpu.CompilerParams(
            dimension_semantics=("parallel",),
            vmem_limit_bytes=vmem_limit,
        ),
    )(xk, w1, b1, w2, b2)
    return out


if __name__ == "__main__":
    # Shapes implied by the module: input_dim=32, output_dim=32, small batch N=16.
    N, D_in, D_out = 16, 32, 32
    key = jax.random.PRNGKey(0)
    kx, kw1, kb1, kw2, kb2 = jax.random.split(key, 5)

    # PyTorch-Linear-style init: U(-1/sqrt(fan_in), 1/sqrt(fan_in)).
    bound1 = 1.0 / jnp.sqrt(jnp.float32(D_in))
    bound2 = 1.0 / jnp.sqrt(jnp.float32(D_out))
    x = jax.random.normal(kx, (N, D_in), dtype=jnp.float32)
    fc1_w = jax.random.uniform(kw1, (D_out, D_in), jnp.float32, -bound1, bound1)
    fc1_b = jax.random.uniform(kb1, (D_out,), jnp.float32, -bound1, bound1)
    fc2_w = jax.random.uniform(kw2, (D_out, D_out), jnp.float32, -bound2, bound2)
    fc2_b = jax.random.uniform(kb2, (D_out,), jnp.float32, -bound2, bound2)

    def ref_mlp(xx):
        h = jnp.maximum(xx @ fc1_w.T + fc1_b, 0.0)
        return h @ fc2_w.T + fc2_b

    # Init-time parameter prep (hoisted out of the per-call path).
    params = prepare_rcaid_mlp_params(fc1_w, fc1_b, fc2_w, fc2_b)

    # Small-batch path (single row tile).
    out = jax.block_until_ready(rcaid_mlp(x, params))
    assert out.shape == (N, D_out)
    assert jnp.allclose(out, ref_mlp(x), atol=1e-5, rtol=1e-5)

    # Larger ragged batch: >= 2 parallel row tiles, ragged final tile.
    N2 = 600
    x2 = jax.random.normal(jax.random.PRNGKey(1), (N2, D_in), dtype=jnp.float32)
    out2 = jax.block_until_ready(rcaid_mlp(x2, params))
    assert out2.shape == (N2, D_out)
    assert jnp.allclose(out2, ref_mlp(x2), atol=1e-5, rtol=1e-5)

    # bf16 MXU-feed path (f32 accumulation / bias / ReLU) -- looser tolerance.
    params_bf16 = prepare_rcaid_mlp_params(fc1_w, fc1_b, fc2_w, fc2_b, use_bf16=True)
    out3 = jax.block_until_ready(rcaid_mlp(x2, params_bf16))
    assert out3.shape == (N2, D_out)
    assert jnp.allclose(out3, ref_mlp(x2), atol=5e-2, rtol=5e-2)

    print("KERNEL_OK")
</pallas_src>

<mosaic_0001>
module attributes {stable_mosaic.version = 11 : i64} {
  func.func @_rcaid_mlp_kernel(%arg0: i32, %arg1: memref<16x32xf32, #tpu.memory_space<vmem>>, %arg2: memref<32x32xf32, #tpu.memory_space<vmem>>, %arg3: memref<1x32xf32, #tpu.memory_space<vmem>>, %arg4: memref<32x32xf32, #tpu.memory_space<vmem>>, %arg5: memref<1x32xf32, #tpu.memory_space<vmem>>, %arg6: memref<16x32xf32, #tpu.memory_space<vmem>>) attributes {dimension_semantics = [#tpu.dimension_semantics<parallel>], iteration_bounds = array<i64: 1>, scalar_prefetch = 0 : i64, scratch_operands = 0 : i64, tpu.core_type = #tpu.core_type<tc>, window_params = [{transform_indices = @transform_0, window_bounds = array<i64: 16, 32>}, {pipeline_mode = #tpu.pipeline_mode<synchronous>, transform_indices = @transform_1, window_bounds = array<i64: 32, 32>}, {pipeline_mode = #tpu.pipeline_mode<synchronous>, transform_indices = @transform_2, window_bounds = array<i64: 1, 32>}, {pipeline_mode = #tpu.pipeline_mode<synchronous>, transform_indices = @transform_3, window_bounds = array<i64: 32, 32>}, {pipeline_mode = #tpu.pipeline_mode<synchronous>, transform_indices = @transform_4, window_bounds = array<i64: 1, 32>}, {transform_indices = @transform_5, window_bounds = array<i64: 16, 32>}]} {
    %c0 = arith.constant 0 : index
    %c0_0 = arith.constant 0 : index
    %0 = vector.load %arg1[%c0, %c0_0] : memref<16x32xf32, #tpu.memory_space<vmem>>, vector<16x32xf32>
    %c0_1 = arith.constant 0 : index
    %c0_2 = arith.constant 0 : index
    %1 = vector.load %arg2[%c0_1, %c0_2] : memref<32x32xf32, #tpu.memory_space<vmem>>, vector<32x32xf32>
    %cst = arith.constant dense<0.000000e+00> : vector<16x32xf32>
    %2 = tpu.matmul %0, %1, %cst {dimension_numbers = #tpu.dot_dimension_numbers<[1], [0], [0], [1], [0, 0, 1, 1], [], []>} : vector<16x32xf32>, vector<32x32xf32>, vector<16x32xf32> -> vector<16x32xf32>
    %c0_3 = arith.constant 0 : index
    %c0_4 = arith.constant 0 : index
    %3 = vector.load %arg3[%c0_3, %c0_4] : memref<1x32xf32, #tpu.memory_space<vmem>>, vector<1x32xf32>
    %4 = vector.broadcast %3 : vector<1x32xf32> to vector<16x32xf32>
    %5 = arith.addf %2, %4 : vector<16x32xf32>
    %cst_5 = arith.constant 0.000000e+00 : f32
    %6 = vector.broadcast %cst_5 : f32 to vector<16x32xf32>
    %7 = arith.maximumf %5, %6 : vector<16x32xf32>
    %c0_6 = arith.constant 0 : index
    %c0_7 = arith.constant 0 : index
    %8 = vector.load %arg4[%c0_6, %c0_7] : memref<32x32xf32, #tpu.memory_space<vmem>>, vector<32x32xf32>
    %cst_8 = arith.constant dense<0.000000e+00> : vector<16x32xf32>
    %9 = tpu.matmul %7, %8, %cst_8 {dimension_numbers = #tpu.dot_dimension_numbers<[1], [0], [0], [1], [0, 0, 1, 1], [], []>} : vector<16x32xf32>, vector<32x32xf32>, vector<16x32xf32> -> vector<16x32xf32>
    %c0_9 = arith.constant 0 : index
    %c0_10 = arith.constant 0 : index
    %10 = vector.load %arg5[%c0_9, %c0_10] : memref<1x32xf32, #tpu.memory_space<vmem>>, vector<1x32xf32>
    %11 = vector.broadcast %10 : vector<1x32xf32> to vector<16x32xf32>
    %12 = arith.addf %9, %11 : vector<16x32xf32>
    %c0_11 = arith.constant 0 : index
    %c0_12 = arith.constant 0 : index
    %13 = vector.load %arg6[%c0_11, %c0_12] : memref<16x32xf32, #tpu.memory_space<vmem>>, vector<16x32xf32>
    tpu.vector_store %arg6[%c0_11, %c0_12], %12 {strides = array<i32>} : memref<16x32xf32, #tpu.memory_space<vmem>>, vector<16x32xf32>,
    return
  }
  func.func @transform_0(%arg0: i32) -> (i32, i32) {
    %c0_i32 = arith.constant 0 : i32
    %c0_i32_0 = arith.constant 0 : i32
    return %arg0, %c0_i32 : i32, i32
  }
  func.func @transform_1(%arg0: i32) -> (i32, i32) {
    %c0_i32 = arith.constant 0 : i32
    %c0_i32_0 = arith.constant 0 : i32
    %c0_i32_1 = arith.constant 0 : i32
    return %c0_i32, %c0_i32_0 : i32, i32
  }
  func.func @transform_2(%arg0: i32) -> (i32, i32) {
    %c0_i32 = arith.constant 0 : i32
    %c0_i32_0 = arith.constant 0 : i32
    %c0_i32_1 = arith.constant 0 : i32
    return %c0_i32, %c0_i32_0 : i32, i32
  }
  func.func @transform_3(%arg0: i32) -> (i32, i32) {
    %c0_i32 = arith.constant 0 : i32
    %c0_i32_0 = arith.constant 0 : i32
    %c0_i32_1 = arith.constant 0 : i32
    return %c0_i32, %c0_i32_0 : i32, i32
  }
  func.func @transform_4(%arg0: i32) -> (i32, i32) {
    %c0_i32 = arith.constant 0 : i32
    %c0_i32_0 = arith.constant 0 : i32
    %c0_i32_1 = arith.constant 0 : i32
    return %c0_i32, %c0_i32_0 : i32, i32
  }
  func.func @transform_5(%arg0: i32) -> (i32, i32) {
    %c0_i32 = arith.constant 0 : i32
    %c0_i32_0 = arith.constant 0 : i32
    return %arg0, %c0_i32 : i32, i32
  }
}

</mosaic_0001>

<llo_original>
// kernel: tpu_custom_call.1
$region0: #{tpu_custom_call.1}
  #allocation0 [shape = 'u32[]', space=smem, size = 0x4, offset = 0x4, fixed_abs, tag = 'smem constant byte address 0x4 - core index']
  #allocation1 [shape = 'u32[144,128]{1,0:T(1,128)}', space=vmem, size = 0x12000, scoped, tag = 'internal scratch']
  %s0 = inlined_call_operand.hbm [shape: f32[16,32], index: 0, kind: input, shape index: {}]
  %s1 = inlined_call_operand.hbm [shape: f32[32,32], index: 1, kind: input, shape index: {}]
  %s2 = inlined_call_operand.vmem [shape: f32[1,32], index: 2, kind: input, shape index: {}]
  %s3 = inlined_call_operand.hbm [shape: f32[32,32], index: 3, kind: input, shape index: {}]
  %s4 = inlined_call_operand.vmem [shape: f32[1,32], index: 4, kind: input, shape index: {}]
  %s5 = inlined_call_operand.hbm [shape: f32[16,32], index: 5, kind: output, shape index: {}]
  %s6 = sld [smem:[#allocation0]]
  $region42: #{tpu_custom_call.1} parent=0
    _
  %s8 = ssub.s32 1, %s6
  %s9 = scalar_select 0, %s8, %s6
  $region1: #{tpu_custom_call.1} parent=0
    #allocation2 [shape = 'u8[8192]{0}', space=vmem, size = 0x2000, scoped, tag = 'input window, operand 0, single buffered']
    #allocation3 [shape = 's32[1]{0}', space=sflag, size = 0x4, scoped, tag = 'scoped memory for tpu_custom_call.1']
    #allocation4 [shape = 's32[1]{0}', space=sflag, size = 0x4, scoped, tag = 'scoped memory for tpu_custom_call.1']
    #allocation5 [shape = 'u8[16384]{0}', space=vmem, size = 0x4000, scoped, tag = 'input window, operand 1, single buffered']
    #allocation6 [shape = 's32[1]{0}', space=sflag, size = 0x4, scoped, tag = 'scoped memory for tpu_custom_call.1']
    #allocation7 [shape = 'u8[16384]{0}', space=vmem, size = 0x4000, scoped, tag = 'input window, operand 3, single buffered']
    #allocation8 [shape = 'u8[8192]{0}', space=vmem, size = 0x2000, scoped, tag = 'output window, operand 0, single buffered']
    %10 = vsyncpa [#allocation3], 0
    %11 = vsyncpa [#allocation6], 0
    %12 = vsyncpa [#allocation4], 0
    // Predicated region
    $region2: #{tpu_custom_call.1} parent=1 // pred_check
      _
    $region3: #{tpu_custom_call.1} parent=1 // pred_check_branch
      %14 = sbr.rel (0) target = $region5
    $region4: #{tpu_custom_call.1} parent=1 // pred_region
      %s16 = ssub.s32 256, 256
      %17 = vsyncadd [#allocation3], %s16
      %s18 = sshll.u32 [#allocation2], 4
      %s19 = int_to_ptr.vmem [resolvable:$true] %s18
      %24 = dma.hbm_to_vmem [thread:$0]  %s0, 256, %s19, [#allocation3], 128, 128, 8
    $region5: #{tpu_custom_call.1} parent=1 // pred_fallthru
      _
    // Predicated region
    $region6: #{tpu_custom_call.1} parent=1 // pred_check
      _
    $region7: #{tpu_custom_call.1} parent=1 // pred_check_branch
      %26 = sbr.rel (0) target = $region9
    $region8: #{tpu_custom_call.1} parent=1 // pred_region
      %s28 = ssub.s32 512, 512
      %29 = vsyncadd [#allocation6], %s28
      %s30 = sshll.u32 [#allocation5], 4
      %s31 = int_to_ptr.vmem [resolvable:$true] %s30
      %36 = dma.hbm_to_vmem [thread:$0]  %s1, 512, %s31, [#allocation6], 128, 128, 8
    $region9: #{tpu_custom_call.1} parent=1 // pred_fallthru
      _
    // Predicated region
    $region10: #{tpu_custom_call.1} parent=1 // pred_check
      _
    $region11: #{tpu_custom_call.1} parent=1 // pred_check_branch
      %38 = sbr.rel (0) target = $region13
    $region12: #{tpu_custom_call.1} parent=1 // pred_region
      _
    $region13: #{tpu_custom_call.1} parent=1 // pred_fallthru
      _
    // Predicated region
    $region14: #{tpu_custom_call.1} parent=1 // pred_check
      _
    $region15: #{tpu_custom_call.1} parent=1 // pred_check_branch
      %40 = sbr.rel (0) target = $region17
    $region16: #{tpu_custom_call.1} parent=1 // pred_region
      %s42 = ssub.s32 512, 512
      %43 = vsyncadd [#allocation6], %s42
      %s44 = sshll.u32 [#allocation7], 4
      %s45 = int_to_ptr.vmem [resolvable:$true] %s44
      %50 = dma.hbm_to_vmem [thread:$0]  %s3, 512, %s45, [#allocation6], 128, 128, 8
    $region17: #{tpu_custom_call.1} parent=1 // pred_fallthru
      _
    // Predicated region
    $region18: #{tpu_custom_call.1} parent=1 // pred_check
      _
    $region19: #{tpu_custom_call.1} parent=1 // pred_check_branch
      %52 = sbr.rel (0) target = $region21
    $region20: #{tpu_custom_call.1} parent=1 // pred_region
      _
    $region21: #{tpu_custom_call.1} parent=1 // pred_fallthru
      _
    // Predicated region
    $region22: #{tpu_custom_call.1} parent=1 // pred_check
      _
    $region23: #{tpu_custom_call.1} parent=1 // pred_check_branch
      %54 = sbr.rel (0) target = $region25
    $region24: #{tpu_custom_call.1} parent=1 // pred_region
      %55 = dma.done [#allocation3], 256
    $region25: #{tpu_custom_call.1} parent=1 // pred_fallthru
      _
    // Predicated region
    $region26: #{tpu_custom_call.1} parent=1 // pred_check
      _
    $region27: #{tpu_custom_call.1} parent=1 // pred_check_branch
      %57 = sbr.rel (0) target = $region29
    $region28: #{tpu_custom_call.1} parent=1 // pred_region
      %58 = dma.done [#allocation6], 512
    $region29: #{tpu_custom_call.1} parent=1 // pred_fallthru
      _
    // Predicated region
    $region30: #{tpu_custom_call.1} parent=1 // pred_check
      _
    $region31: #{tpu_custom_call.1} parent=1 // pred_check_branch
      %60 = sbr.rel (0) target = $region33
    $region32: #{tpu_custom_call.1} parent=1 // pred_region
      %61 = dma.done [#allocation6], 512
    $region33: #{tpu_custom_call.1} parent=1 // pred_fallthru
      _
    %v62 = vld [vmem:[#allocation2] sm:$0xff]
    %v63 = vld [vmem:[#allocation2 + $0x8] sm:$0xff]
    %v64 = vld [vmem:[#allocation5] sm:$0xff]
    %v65 = vld [vmem:[#allocation5 + $0x8] sm:$0xff]
    %v66 = vld [vmem:[#allocation5 + $0x10] sm:$0xff]
    %v67 = vld [vmem:[#allocation5 + $0x18] sm:$0xff]
    %v68 = vld [vmem:[%s2] sm:$0x1]
    %v70 = vlaneseq
    %v71 = vshrl.u32 %v70, 7
    %v72 = vsub.s32 0, %v71
    %v73 = vrot.slane %v68, %v72
    %vm75 = vcmask 261120
    %v77 = vsel %vm75, %v62, 0
    %v80 = vsel %vm75, %v63, 0
    %82 = vmatprep.subr.mxu0 0.0
    %83 = vmatpush1.msra.mxu0 %v64
    %84 = vmatprep.subr.mxu0 0.0
    %85 = vmatpush1.msra.mxu0 %v65
    %86 = vmatprep.subr.mxu0 0.0
    %87 = vmatpush1.msra.mxu0 %v66
    %88 = vmatprep.subr.mxu0 0.0
    %89 = vmatpush1.msra.mxu0 %v67
    %90 = vmatprep.subr.mxu0 0.0
    %91 = vmatpush1.msra.mxu0 0.0
    %92 = vmatprep.subr.mxu0 0.0
    %93 = vmatpush1.msra.mxu0 0.0
    %94 = vmatprep.subr.mxu0 0.0
    %95 = vmatpush1.msra.mxu0 0.0
    %96 = vmatprep.subr.mxu0 0.0
    %97 = vmatpush1.msra.mxu0 0.0
    %98 = vmatprep.subr.mxu0 0.0
    %99 = vmatpush1.msra.mxu0 0.0
    %100 = vmatprep.subr.mxu0 0.0
    %101 = vmatpush1.msra.mxu0 0.0
    %102 = vmatprep.subr.mxu0 0.0
    %103 = vmatpush1.msra.mxu0 0.0
    %104 = vmatprep.subr.mxu0 0.0
    %105 = vmatpush1.msra.mxu0 0.0
    %106 = vmatprep.subr.mxu0 0.0
    %107 = vmatpush1.msra.mxu0 0.0
    %108 = vmatprep.subr.mxu0 0.0
    %109 = vmatpush1.msra.mxu0 0.0
    %110 = vmatprep.subr.mxu0 0.0
    %111 = vmatpush1.msra.mxu0 0.0
    %112 = vmatprep.subr.mxu0 0.0
    %113 = vmatpush1.msra.mxu0 0.0
    %114 = vmatprep.subr.mxu0 0.0
    %115 = vmatpush1.msra.mxu0 0.0
    %116 = vmatprep.subr.mxu0 0.0
    %117 = vmatpush1.msra.mxu0 0.0
    %118 = vmatprep.subr.mxu0 0.0
    %119 = vmatpush1.msra.mxu0 0.0
    %120 = vmatprep.subr.mxu0 0.0
    %121 = vmatpush1.msra.mxu0 0.0
    %122 = vmatprep.subr.mxu0 0.0
    %123 = vmatpush1.msra.mxu0 0.0
    %124 = vmatprep.subr.mxu0 0.0
    %125 = vmatpush1.msra.mxu0 0.0
    %126 = vmatprep.subr.mxu0 0.0
    %127 = vmatpush1.msra.mxu0 0.0
    %128 = vmatprep.subr.mxu0 0.0
    %129 = vmatpush1.msra.mxu0 0.0
    %130 = vmatprep.subr.mxu0 0.0
    %131 = vmatpush1.msra.mxu0 0.0
    %132 = vmatprep.subr.mxu0 0.0
    %133 = vmatpush1.msra.mxu0 0.0
    %134 = vmatprep.subr.mxu0 0.0
    %135 = vmatpush1.msra.mxu0 0.0
    %136 = vmatprep.subr.mxu0 0.0
    %137 = vmatpush1.msra.mxu0 0.0
    %138 = vmatprep.subr.mxu0 0.0
    %139 = vmatpush1.msra.mxu0 0.0
    %140 = vmatprep.subr.mxu0 0.0
    %141 = vmatpush1.msra.mxu0 0.0
    %142 = vmatprep.subr.mxu0 0.0
    %143 = vmatpush1.msra.mxu0 0.0
    %144 = vmatprep.subr.mxu0 0.0
    %145 = vmatpush1.msra.mxu0 0.0
    %146 = vmatprep.mubr.f32.mxu0 0.0
    %147 = vmatmul.mubr.f32.gmra.mrb[0].mxu0 %v77
    %v148 = vpop.f32.mrb[0].mxu0
    %v149 = vadd.f32 %v73, %v148
    %v150 = vpop.f32.mrb[0].mxu0
    %151 = vmatprep.mubr.f32.mxu0 0.0
    %152 = vmatmul.mubr.f32.gmra.mrb[0].mxu0 %v80
    %v153 = vpop.f32.mrb[0].mxu0
    %v154 = vadd.f32 %v73, %v153
    %v155 = vpop.f32.mrb[0].mxu0
    %156 = vdwg.mxu0
    %v157 = vmax.f32 %v149, 0.0
    %v158 = vmax.f32 %v154, 0.0
    %v159 = vld [vmem:[#allocation7] sm:$0xff]
    %v160 = vld [vmem:[#allocation7 + $0x8] sm:$0xff]
    %v161 = vld [vmem:[#allocation7 + $0x10] sm:$0xff]
    %v162 = vld [vmem:[#allocation7 + $0x18] sm:$0xff]
    %v163 = vld [vmem:[%s4] sm:$0x1]
    %v165 = vlaneseq
    %v166 = vshrl.u32 %v165, 7
    %v167 = vsub.s32 0, %v166
    %v168 = vrot.slane %v163, %v167
    %v171 = vsel %vm75, %v157, 0
    %v174 = vsel %vm75, %v158, 0
    %176 = vmatprep.subr.mxu0 0.0
    %177 = vmatpush1.msra.mxu0 %v159
    %178 = vmatprep.subr.mxu0 0.0
    %179 = vmatpush1.msra.mxu0 %v160
    %180 = vmatprep.subr.mxu0 0.0
    %181 = vmatpush1.msra.mxu0 %v161
    %182 = vmatprep.subr.mxu0 0.0
    %183 = vmatpush1.msra.mxu0 %v162
    %184 = vmatprep.subr.mxu0 0.0
    %185 = vmatpush1.msra.mxu0 0.0
    %186 = vmatprep.subr.mxu0 0.0
    %187 = vmatpush1.msra.mxu0 0.0
    %188 = vmatprep.subr.mxu0 0.0
    %189 = vmatpush1.msra.mxu0 0.0
    %190 = vmatprep.subr.mxu0 0.0
    %191 = vmatpush1.msra.mxu0 0.0
    %192 = vmatprep.subr.mxu0 0.0
    %193 = vmatpush1.msra.mxu0 0.0
    %194 = vmatprep.subr.mxu0 0.0
    %195 = vmatpush1.msra.mxu0 0.0
    %196 = vmatprep.subr.mxu0 0.0
    %197 = vmatpush1.msra.mxu0 0.0
    %198 = vmatprep.subr.mxu0 0.0
    %199 = vmatpush1.msra.mxu0 0.0
    %200 = vmatprep.subr.mxu0 0.0
    %201 = vmatpush1.msra.mxu0 0.0
    %202 = vmatprep.subr.mxu0 0.0
    %203 = vmatpush1.msra.mxu0 0.0
    %204 = vmatprep.subr.mxu0 0.0
    %205 = vmatpush1.msra.mxu0 0.0
    %206 = vmatprep.subr.mxu0 0.0
    %207 = vmatpush1.msra.mxu0 0.0
    %208 = vmatprep.subr.mxu0 0.0
    %209 = vmatpush1.msra.mxu0 0.0
    %210 = vmatprep.subr.mxu0 0.0
    %211 = vmatpush1.msra.mxu0 0.0
    %212 = vmatprep.subr.mxu0 0.0
    %213 = vmatpush1.msra.mxu0 0.0
    %214 = vmatprep.subr.mxu0 0.0
    %215 = vmatpush1.msra.mxu0 0.0
    %216 = vmatprep.subr.mxu0 0.0
    %217 = vmatpush1.msra.mxu0 0.0
    %218 = vmatprep.subr.mxu0 0.0
    %219 = vmatpush1.msra.mxu0 0.0
    %220 = vmatprep.subr.mxu0 0.0
    %221 = vmatpush1.msra.mxu0 0.0
    %222 = vmatprep.subr.mxu0 0.0
    %223 = vmatpush1.msra.mxu0 0.0
    %224 = vmatprep.subr.mxu0 0.0
    %225 = vmatpush1.msra.mxu0 0.0
    %226 = vmatprep.subr.mxu0 0.0
    %227 = vmatpush1.msra.mxu0 0.0
    %228 = vmatprep.subr.mxu0 0.0
    %229 = vmatpush1.msra.mxu0 0.0
    %230 = vmatprep.subr.mxu0 0.0
    %231 = vmatpush1.msra.mxu0 0.0
    %232 = vmatprep.subr.mxu0 0.0
    %233 = vmatpush1.msra.mxu0 0.0
    %234 = vmatprep.subr.mxu0 0.0
    %235 = vmatpush1.msra.mxu0 0.0
    %236 = vmatprep.subr.mxu0 0.0
    %237 = vmatpush1.msra.mxu0 0.0
    %238 = vmatprep.subr.mxu0 0.0
    %239 = vmatpush1.msra.mxu0 0.0
    %240 = vmatprep.mubr.f32.mxu0 0.0
    %241 = vmatmul.mubr.f32.gmra.mrb[0].mxu0 %v171
    %v242 = vpop.f32.mrb[0].mxu0
    %v243 = vadd.f32 %v168, %v242
    %v244 = vpop.f32.mrb[0].mxu0
    %245 = vmatprep.mubr.f32.mxu0 0.0
    %246 = vmatmul.mubr.f32.gmra.mrb[0].mxu0 %v174
    %v247 = vpop.f32.mrb[0].mxu0
    %v248 = vadd.f32 %v168, %v247
    %v249 = vpop.f32.mrb[0].mxu0
    %250 = vdwg.mxu0
    %251 = vst.msk [vmem:[#allocation8] sm:$0xff] %vm75, %v243
    %252 = vst.msk [vmem:[#allocation8 + $0x8] sm:$0xff] %vm75, %v248
    // Predicated region
    $region34: #{tpu_custom_call.1} parent=1 // pred_check
      _
    $region35: #{tpu_custom_call.1} parent=1 // pred_check_branch
      %254 = sbr.rel (0) target = $region37
    $region36: #{tpu_custom_call.1} parent=1 // pred_region
      %s256 = ssub.s32 256, 256
      %257 = vsyncadd [#allocation4], %s256
      %s258 = sshll.u32 [#allocation8], 4
      %s259 = int_to_ptr.vmem [resolvable:$true] %s258
      %264 = dma.vmem_to_hbm [thread:$0]  %s259, 256, %s5, [#allocation4], 128, 128, 8
    $region37: #{tpu_custom_call.1} parent=1 // pred_fallthru
      _
    // Predicated region
    $region38: #{tpu_custom_call.1} parent=1 // pred_check
      _
    $region39: #{tpu_custom_call.1} parent=1 // pred_check_branch
      %266 = sbr.rel (0) target = $region41
    $region40: #{tpu_custom_call.1} parent=1 // pred_region
      %267 = dma.done [#allocation4], 256
    $region41: #{tpu_custom_call.1} parent=1 // pred_fallthru
      _
    %268 = vsyncpa [#allocation3], 1
    %269 = vsyncpa [#allocation6], 1
    %270 = vsyncpa [#allocation4], 1

</llo_original>
